<compile_context>
chip_gen: v6e
topology: v6e:2x2x1
jax: 0.10.0
libtpu: 0.0.40
codegen_flags: <defaults>
</compile_context>

<pallas_src>
import jax
import jax.numpy as jnp
from jax.experimental import pallas as pl
from jax.experimental.pallas import tpu as pltpu


def _round_up(x, m):
    return ((x + m - 1) // m) * m


def _linear_kernel(x_ref, wt_ref, b_ref, o_ref):
    # x_ref: (TM, D), wt_ref: (D, C), b_ref: (1, C), o_ref: (TM, C)
    logits = jnp.dot(x_ref[...], wt_ref[...], preferred_element_type=jnp.float32)
    o_ref[...] = (logits + b_ref[...]).astype(o_ref.dtype)


def _choose_tm(B):
    """Batch tile: large (amortize per-step overhead), but >=2 tiles when B is
    big enough so both v7x TensorCores get a share of the 'parallel' grid."""
    half = _round_up((B + 1) // 2, 8)   # ceil(B/2) rounded to sublane granularity
    return max(8, min(4096, half))


def sentiment_classifier_forward(inp, weight, bias, *, force_pallas=False):
    """logits = inp @ weight.T + bias  (PyTorch nn.Linear semantics).

    inp:    (B, D) float32
    weight: (C, D) float32   (nn.Linear layout)
    bias:   (C,)   float32
    returns (B, C) float32
    """
    B, D = inp.shape
    C, D2 = weight.shape
    assert D == D2, (D, D2)

    # Small-batch fallback: at tiny sizes the pallas_call launch plus wrapper
    # ops dominate; a single fused XLA op is strictly faster.
    if not force_pallas and B * D * inp.dtype.itemsize < (1 << 20):
        return inp @ weight.T + bias

    # Wrapper-side layout plumbing (tiny, trace-time): pre-transpose W -> (D, C)
    # so the kernel feeds the MXU directly with no in-kernel transpose.
    wt = weight.T                     # (D, C)
    b2 = bias.reshape(1, C)           # (1, C)

    tm = _choose_tm(B)
    grid = (pl.cdiv(B, tm),)          # ragged last block is masked by Pallas

    flops = 2 * B * D * C
    bytes_accessed = 4 * (B * D + D * C + C + B * C)

    return pl.pallas_call(
        _linear_kernel,
        out_shape=jax.ShapeDtypeStruct((B, C), jnp.float32),
        grid_spec=pltpu.PrefetchScalarGridSpec(
            num_scalar_prefetch=0,
            grid=grid,
            in_specs=[
                pl.BlockSpec((tm, D), lambda i: (i, 0)),   # X: tiled over batch
                pl.BlockSpec((D, C), lambda i: (0, 0)),    # W^T: VMEM-resident
                pl.BlockSpec((1, C), lambda i: (0, 0)),    # bias: VMEM-resident
            ],
            out_specs=pl.BlockSpec((tm, C), lambda i: (i, 0)),
        ),
        compiler_params=pltpu.CompilerParams(
            dimension_semantics=("parallel",),  # shard batch tiles across TCs (v7x)
        ),
        cost_estimate=pl.CostEstimate(
            flops=flops, transcendentals=0, bytes_accessed=bytes_accessed,
        ),
    )(inp, wt, b2)


if __name__ == "__main__":
    # Small shapes consistent with the module: embed_dim=32, num_classes=4.
    embed_dim, num_classes = 32, 4

    key = jax.random.PRNGKey(0)
    k_x, k_x2, k_w, k_b = jax.random.split(key, 4)

    # Deterministic parameter init (mimics nn.Linear's U(-1/sqrt(fan_in), +1/sqrt(fan_in))).
    bound = 1.0 / jnp.sqrt(jnp.float32(embed_dim))
    weight = jax.random.uniform(
        k_w, (num_classes, embed_dim), dtype=jnp.float32, minval=-bound, maxval=bound
    )
    bias = jax.random.uniform(
        k_b, (num_classes,), dtype=jnp.float32, minval=-bound, maxval=bound
    )

    # 1) Tiny batch, Pallas path forced (single tile, grid=(1,)).
    batch = 8
    inp = jax.random.normal(k_x, (batch, embed_dim), dtype=jnp.float32)
    logits = sentiment_classifier_forward(inp, weight, bias, force_pallas=True)
    logits = jax.block_until_ready(logits)
    ref = inp @ weight.T + bias
    assert logits.shape == (batch, num_classes), logits.shape
    assert jnp.allclose(logits, ref, atol=1e-5, rtol=1e-5)

    # 2) Ragged multi-tile batch (B not a multiple of the tile): exercises the
    #    cdiv grid + masked last block and the 2-tile "parallel" split.
    batch2 = 300
    inp2 = jax.random.normal(k_x2, (batch2, embed_dim), dtype=jnp.float32)
    logits2 = sentiment_classifier_forward(inp2, weight, bias, force_pallas=True)
    logits2 = jax.block_until_ready(logits2)
    ref2 = inp2 @ weight.T + bias
    assert logits2.shape == (batch2, num_classes), logits2.shape
    assert jnp.allclose(logits2, ref2, atol=1e-5, rtol=1e-5)

    # 3) Auto path: tiny batch falls back to the fused XLA op.
    logits3 = jax.block_until_ready(sentiment_classifier_forward(inp, weight, bias))
    assert jnp.allclose(logits3, ref, atol=1e-5, rtol=1e-5)

    print("KERNEL_OK")
</pallas_src>

<mosaic_0001>
module attributes {stable_mosaic.version = 11 : i64} {
  func.func @_linear_kernel(%arg0: i32, %arg1: memref<8x32xf32, #tpu.memory_space<vmem>>, %arg2: memref<32x4xf32, #tpu.memory_space<vmem>>, %arg3: memref<1x4xf32, #tpu.memory_space<vmem>>, %arg4: memref<8x4xf32, #tpu.memory_space<vmem>>) attributes {dimension_semantics = [#tpu.dimension_semantics<parallel>], iteration_bounds = array<i64: 1>, scalar_prefetch = 0 : i64, scratch_operands = 0 : i64, tpu.core_type = #tpu.core_type<tc>, window_params = [{transform_indices = @transform_0, window_bounds = array<i64: 8, 32>}, {pipeline_mode = #tpu.pipeline_mode<synchronous>, transform_indices = @transform_1, window_bounds = array<i64: 32, 4>}, {pipeline_mode = #tpu.pipeline_mode<synchronous>, transform_indices = @transform_2, window_bounds = array<i64: 1, 4>}, {transform_indices = @transform_3, window_bounds = array<i64: 8, 4>}]} {
    %c0 = arith.constant 0 : index
    %c0_0 = arith.constant 0 : index
    %0 = vector.load %arg1[%c0, %c0_0] : memref<8x32xf32, #tpu.memory_space<vmem>>, vector<8x32xf32>
    %c0_1 = arith.constant 0 : index
    %c0_2 = arith.constant 0 : index
    %1 = vector.load %arg2[%c0_1, %c0_2] : memref<32x4xf32, #tpu.memory_space<vmem>>, vector<32x4xf32>
    %cst = arith.constant dense<0.000000e+00> : vector<8x4xf32>
    %2 = tpu.matmul %0, %1, %cst {dimension_numbers = #tpu.dot_dimension_numbers<[1], [0], [0], [1], [0, 0, 1, 1], [], []>} : vector<8x32xf32>, vector<32x4xf32>, vector<8x4xf32> -> vector<8x4xf32>
    %c0_3 = arith.constant 0 : index
    %c0_4 = arith.constant 0 : index
    %3 = vector.load %arg3[%c0_3, %c0_4] : memref<1x4xf32, #tpu.memory_space<vmem>>, vector<1x4xf32>
    %4 = vector.broadcast %3 : vector<1x4xf32> to vector<8x4xf32>
    %5 = arith.addf %2, %4 : vector<8x4xf32>
    %c0_5 = arith.constant 0 : index
    %c0_6 = arith.constant 0 : index
    %6 = vector.load %arg4[%c0_5, %c0_6] : memref<8x4xf32, #tpu.memory_space<vmem>>, vector<8x4xf32>
    tpu.vector_store %arg4[%c0_5, %c0_6], %5 {strides = array<i32>} : memref<8x4xf32, #tpu.memory_space<vmem>>, vector<8x4xf32>,
    return
  }
  func.func @transform_0(%arg0: i32) -> (i32, i32) {
    %c0_i32 = arith.constant 0 : i32
    %c0_i32_0 = arith.constant 0 : i32
    return %arg0, %c0_i32 : i32, i32
  }
  func.func @transform_1(%arg0: i32) -> (i32, i32) {
    %c0_i32 = arith.constant 0 : i32
    %c0_i32_0 = arith.constant 0 : i32
    %c0_i32_1 = arith.constant 0 : i32
    return %c0_i32, %c0_i32_0 : i32, i32
  }
  func.func @transform_2(%arg0: i32) -> (i32, i32) {
    %c0_i32 = arith.constant 0 : i32
    %c0_i32_0 = arith.constant 0 : i32
    %c0_i32_1 = arith.constant 0 : i32
    return %c0_i32, %c0_i32_0 : i32, i32
  }
  func.func @transform_3(%arg0: i32) -> (i32, i32) {
    %c0_i32 = arith.constant 0 : i32
    %c0_i32_0 = arith.constant 0 : i32
    return %arg0, %c0_i32 : i32, i32
  }
}

</mosaic_0001>

<llo_original>
// kernel: tpu_custom_call.1
$region0: #{tpu_custom_call.1}
  #allocation0 [shape = 'u32[]', space=smem, size = 0x4, offset = 0x4, fixed_abs, tag = 'smem constant byte address 0x4 - core index']
  #allocation1 [shape = 'u32[144,128]{1,0:T(1,128)}', space=vmem, size = 0x12000, scoped, tag = 'internal scratch']
  %s0 = inlined_call_operand.vmem [shape: f32[8,32], index: 0, kind: input, shape index: {}]
  %s1 = inlined_call_operand.vmem [shape: f32[32,4], index: 1, kind: input, shape index: {}]
  %s2 = inlined_call_operand.vmem [shape: f32[1,4], index: 2, kind: input, shape index: {}]
  %s3 = inlined_call_operand.vmem [shape: f32[8,4], index: 3, kind: output, shape index: {}]
  %s4 = sld [smem:[#allocation0]]
  $region22: #{tpu_custom_call.1} parent=0
    _
  %s6 = ssub.s32 1, %s4
  %s7 = scalar_select 0, %s6, %s4
  // Predicated region
  $region2: #{tpu_custom_call.1} parent=0 // pred_check
    _
  $region3: #{tpu_custom_call.1} parent=0 // pred_check_branch
    %9 = sbr.rel (0) target = $region5
  $region4: #{tpu_custom_call.1} parent=0 // pred_region
    _
  $region5: #{tpu_custom_call.1} parent=0 // pred_fallthru
    _
  // Predicated region
  $region6: #{tpu_custom_call.1} parent=0 // pred_check
    _
  $region7: #{tpu_custom_call.1} parent=0 // pred_check_branch
    %11 = sbr.rel (0) target = $region9
  $region8: #{tpu_custom_call.1} parent=0 // pred_region
    _
  $region9: #{tpu_custom_call.1} parent=0 // pred_fallthru
    _
  // Predicated region
  $region10: #{tpu_custom_call.1} parent=0 // pred_check
    _
  $region11: #{tpu_custom_call.1} parent=0 // pred_check_branch
    %13 = sbr.rel (0) target = $region13
  $region12: #{tpu_custom_call.1} parent=0 // pred_region
    _
  $region13: #{tpu_custom_call.1} parent=0 // pred_fallthru
    _
  %v14 = vld [vmem:[%s0] sm:$0xff]
  %v15 = vld [vmem:[%s1] sm:$0xff]
  %v16 = vld [vmem:[%s1 + $0x8] sm:$0xff]
  %v17 = vld [vmem:[%s1 + $0x10] sm:$0xff]
  %v18 = vld [vmem:[%s1 + $0x18] sm:$0xff]
  %v19 = vld [vmem:[%s2] sm:$0x1]
  %v21 = vlaneseq
  %v22 = vshrl.u32 %v21, 7
  %v23 = vsub.s32 0, %v22
  %v24 = vrot.slane %v19, %v23
  %vm26 = vcmask 261120
  %v28 = vsel %vm26, %v14, 0
  %30 = vmatprep.subr.mxu0 0.0
  %31 = vmatpush1.msra.mxu0 0.0
  %32 = vmatprep.subr.mxu0 0.0
  %33 = vmatpush1.msra.mxu0 0.0
  %34 = vmatprep.subr.mxu0 0.0
  %35 = vmatpush1.msra.mxu0 0.0
  %36 = vmatprep.subr.mxu0 0.0
  %37 = vmatpush1.msra.mxu0 0.0
  %38 = vmatprep.subr.mxu0 0.0
  %39 = vmatpush1.msra.mxu0 0.0
  %40 = vmatprep.subr.mxu0 0.0
  %41 = vmatpush1.msra.mxu0 0.0
  %42 = vmatprep.subr.mxu0 0.0
  %43 = vmatpush1.msra.mxu0 0.0
  %44 = vmatprep.subr.mxu0 0.0
  %45 = vmatpush1.msra.mxu0 0.0
  %46 = vmatprep.subr.mxu0 0.0
  %47 = vmatpush1.msra.mxu0 0.0
  %48 = vmatprep.subr.mxu0 0.0
  %49 = vmatpush1.msra.mxu0 0.0
  %50 = vmatprep.subr.mxu0 0.0
  %51 = vmatpush1.msra.mxu0 0.0
  %52 = vmatprep.subr.mxu0 0.0
  %53 = vmatpush1.msra.mxu0 0.0
  %54 = vmatprep.subr.mxu0 0.0
  %55 = vmatpush1.msra.mxu0 %v18
  %56 = vmatprep.subr.mxu0 0.0
  %57 = vmatpush1.msra.mxu0 %v17
  %58 = vmatprep.subr.mxu0 0.0
  %59 = vmatpush1.msra.mxu0 %v16
  %60 = vmatprep.subr.mxu0 0.0
  %61 = vmatpush1.msra.mxu0 %v15
  %62 = vmatprep.subr.mxu0 0.0
  %63 = vmatpush2.msra.mxu0 0.0
  %64 = vmatprep.subr.mxu0 0.0
  %65 = vmatpush2.msra.mxu0 0.0
  %66 = vmatprep.subr.mxu0 0.0
  %67 = vmatpush2.msra.mxu0 0.0
  %68 = vmatprep.subr.mxu0 0.0
  %69 = vmatpush2.msra.mxu0 0.0
  %70 = vmatprep.subr.mxu0 0.0
  %71 = vmatpush2.msra.mxu0 0.0
  %72 = vmatprep.subr.mxu0 0.0
  %73 = vmatpush2.msra.mxu0 0.0
  %74 = vmatprep.subr.mxu0 0.0
  %75 = vmatpush2.msra.mxu0 0.0
  %76 = vmatprep.subr.mxu0 0.0
  %77 = vmatpush2.msra.mxu0 0.0
  %78 = vmatprep.subr.mxu0 0.0
  %79 = vmatpush2.msra.mxu0 0.0
  %80 = vmatprep.subr.mxu0 0.0
  %81 = vmatpush2.msra.mxu0 0.0
  %82 = vmatprep.subr.mxu0 0.0
  %83 = vmatpush2.msra.mxu0 0.0
  %84 = vmatprep.subr.mxu0 0.0
  %85 = vmatpush2.msra.mxu0 0.0
  %86 = vmatprep.subr.mxu0 0.0
  %87 = vmatpush2.msra.mxu0 0.0
  %88 = vmatprep.subr.mxu0 0.0
  %89 = vmatpush2.msra.mxu0 0.0
  %90 = vmatprep.subr.mxu0 0.0
  %91 = vmatpush2.msra.mxu0 0.0
  %92 = vmatprep.subr.mxu0 0.0
  %93 = vmatpush2.msra.mxu0 0.0
  %94 = vmatprep.mubr.f32.mxu0 0.0
  %95 = vmatmul.mubr.f32.gmra.mxu0 %v28
  %v96 = vpop.f32.mrf.mxu0
  %v97 = vadd.f32 %v24, %v96
  %v98 = vpop.f32.mrf.mxu0
  %99 = vdwg.mxu0
  %vm100 = vcmask 31744
  %101 = vst.msk [vmem:[%s3] sm:$0xff] %vm100, %v97
  // Predicated region
  $region14: #{tpu_custom_call.1} parent=0 // pred_check
    _
  $region15: #{tpu_custom_call.1} parent=0 // pred_check_branch
    %103 = sbr.rel (0) target = $region17
  $region16: #{tpu_custom_call.1} parent=0 // pred_region
    _
  $region17: #{tpu_custom_call.1} parent=0 // pred_fallthru
    _
  // Predicated region
  $region18: #{tpu_custom_call.1} parent=0 // pred_check
    _
  $region19: #{tpu_custom_call.1} parent=0 // pred_check_branch
    %105 = sbr.rel (0) target = $region21
  $region20: #{tpu_custom_call.1} parent=0 // pred_region
    _
  $region21: #{tpu_custom_call.1} parent=0 // pred_fallthru
    _

</llo_original>
